<compile_context>
chip_gen: v6e
topology: v6e:2x2x1
jax: 0.10.0
libtpu: 0.0.40
codegen_flags: <defaults>
</compile_context>

<pallas_src>
import jax
import jax.numpy as jnp
from jax.experimental import pallas as pl
from jax.experimental.pallas import tpu as pltpu


def _step_vmem_bytes(bb, T, H):
    """Rough per-grid-step VMEM working set (bytes) for batch block bb (f32)."""
    io = 2 * 4 * (3 * bb * T * H + bb * H + bb * T)   # double-buffered q/k/v + outputs
    wts = 2 * 4 * (2 * H * H + 3 * H + 8)             # double-buffered weights/biases
    tmp = 4 * (2 * bb * T * H + 4 * bb * T)           # h + score/exp temporaries
    return io + wts + tmp


def _choose_block_b(B, T, H, vmem_budget_bytes=24 << 20):
    """VMEM-aware batch-block size.

    Largest multiple of 8 whose working set fits the budget; capped so the grid has
    >= 2 parallel steps when B >= 16 (so dimension_semantics=("parallel",) can shard
    batch blocks across both v7x TensorCores; harmless on v5e/v6e)."""
    if B <= 8:
        return B
    cap = max(8, (((B + 1) // 2) // 8) * 8)           # guarantee >= 2 grid steps
    bb = min((B // 8) * 8, cap)
    while bb > 8 and _step_vmem_bytes(bb, T, H) > vmem_budget_bytes:
        bb -= 8
    return bb


def _bahdanau_kernel(lens_ref,      # (BB, 1)    int32  valid lengths
                     q_ref,         # (BB, T, H) f32    query
                     k_ref,         # (BB, T, H) f32    key
                     v_ref,         # (BB, T, H) f32    value
                     wq_ref,        # (H, H)     f32    linear_q weight
                     wk_ref,        # (H, H)     f32    linear_k weight
                     bqk_ref,       # (1, H)     f32    bq + bk
                     wz_ref,        # (1, H)     f32    linear_z weight row
                     bz_ref,        # (1, 1)     f32    linear_z bias
                     out_val_ref,   # (BB, H)    f32    attention value (H lane-dense)
                     out_w_ref):    # (BB, T)    f32    attention weights (T lane-dense)
    BB, T, H = q_ref.shape

    # Projection: two MXU dots (K split H + H instead of a concat'd 2H), f32 accumulate.
    q2 = q_ref[...].reshape(BB * T, H)
    k2 = k_ref[...].reshape(BB * T, H)
    h = jnp.tanh(
        jnp.dot(q2, wq_ref[...], preferred_element_type=jnp.float32)
        + jnp.dot(k2, wk_ref[...], preferred_element_type=jnp.float32)
        + bqk_ref[...])
    h3 = h.reshape(BB, T, H)

    # linear_z as elementwise multiply + lane reduce over H (avoids an N=1 MXU matmul).
    s = jnp.sum(h3 * wz_ref[...].reshape(1, 1, H), axis=-1) + bz_ref[...]    # (BB, T)

    # mask: positions t >= lengths[b] get exactly -1e9 (matches the in-place assign;
    # keep the finite constant so fully-masked padded rows don't produce NaN).
    t_idx = jax.lax.broadcasted_iota(jnp.int32, (BB, T), 1)
    s = jnp.where(t_idx >= lens_ref[...], jnp.float32(-1000000000.0), s)

    # softmax over T with T on the lane axis; one reciprocal per row + VPU multiply.
    m = jnp.max(s, axis=-1, keepdims=True)
    e = jnp.exp(s - m)
    inv = pl.reciprocal(jnp.sum(e, axis=-1, keepdims=True), approx=False)
    w = e * inv                                                              # (BB, T)

    out_w_ref[...] = w.astype(out_w_ref.dtype)
    # att_value: weighted sum over T (sublane reduce), H stays on lanes.
    out_val_ref[...] = jnp.sum(w[:, :, None] * v_ref[...], axis=1).astype(out_val_ref.dtype)


def bahdanau_attention(query, key, value, lengths, params, *,
                       block_b=None, vmem_budget_bytes=24 << 20):
    """query/key/value: (B, T, H) float32; lengths: (B,) int32."""
    B, T, H = query.shape
    wq, bq, wk, bk, wz, bz = params

    # --- batch-block size (VMEM-aware, MXU/megacore friendly) ---------------
    BB = block_b if block_b is not None else _choose_block_b(B, T, H, vmem_budget_bytes)
    BB = max(1, min(BB, B))
    Bp = pl.cdiv(B, BB) * BB

    # --- wrapper-side layout plumbing (no activation-sized concats) ---------
    q = query.astype(jnp.float32)
    k = key.astype(jnp.float32)
    v = value.astype(jnp.float32)
    wq_m = wq.astype(jnp.float32)                                            # (H, H)
    wk_m = wk.astype(jnp.float32)                                            # (H, H)
    bqk = (bq + bk).reshape(1, H).astype(jnp.float32)                        # (1, H)
    wz_row = wz.reshape(1, H).astype(jnp.float32)                            # (1, H)
    bz2 = bz.reshape(1, 1).astype(jnp.float32)                               # (1, 1)
    lens2d = lengths.astype(jnp.int32).reshape(B, 1)

    if Bp != B:                                   # pad batch to a multiple of BB
        pad = Bp - B
        q = jnp.pad(q, ((0, pad), (0, 0), (0, 0)))
        k = jnp.pad(k, ((0, pad), (0, 0), (0, 0)))
        v = jnp.pad(v, ((0, pad), (0, 0), (0, 0)))
        lens2d = jnp.pad(lens2d, ((0, pad), (0, 0)))   # length 0 -> uniform weights, sliced off

    grid = (Bp // BB,)
    batched3 = lambda: pl.BlockSpec((BB, T, H), lambda b: (b, 0, 0))
    batched2 = lambda shape: pl.BlockSpec(shape, lambda b: (b, 0))
    const2 = lambda shape: pl.BlockSpec(shape, lambda b: (0, 0))

    # Explicit scoped-VMEM limit matched to the tile (>= 32 MiB default, <= 56 MiB
    # so it stays inside v7x's 64 MiB physical VMEM per TensorCore).
    vmem_limit = int(min(max(2 * _step_vmem_bytes(BB, T, H), 32 << 20), 56 << 20))

    att_value2d, att_weights2d = pl.pallas_call(
        _bahdanau_kernel,
        out_shape=(
            jax.ShapeDtypeStruct((Bp, H), jnp.float32),
            jax.ShapeDtypeStruct((Bp, T), jnp.float32),
        ),
        grid=grid,
        in_specs=[
            batched2((BB, 1)),            # lengths
            batched3(),                   # query
            batched3(),                   # key
            batched3(),                   # value
            const2((H, H)),               # Wq
            const2((H, H)),               # Wk
            const2((1, H)),               # bq + bk
            const2((1, H)),               # wz
            const2((1, 1)),               # bz
        ],
        out_specs=[
            batched2((BB, H)),            # att_value (H lane-dense)
            batched2((BB, T)),            # att_weights (T lane-dense)
        ],
        compiler_params=pltpu.CompilerParams(
            dimension_semantics=("parallel",),
            vmem_limit_bytes=vmem_limit),
    )(lens2d, q, k, v, wq_m, wk_m, bqk, wz_row, bz2)

    att_value = att_value2d[:B].reshape(B, 1, H)
    att_weights = att_weights2d[:B].reshape(B, T, 1)
    return att_value, att_weights


def bahdanau_reference(query, key, value, lengths, params):
    """Pure-JAX reference mirroring the PyTorch forward."""
    wq, bq, wk, bk, wz, bz = params
    q = query @ wq + bq
    k = key @ wk + bk
    s = jnp.tanh(q + k) @ wz.reshape(-1, 1) + bz          # (B, T, 1)
    T = query.shape[1]
    t_idx = jnp.arange(T)[None, :, None]
    mask = t_idx >= lengths[:, None, None]
    s = jnp.where(mask, -1000000000.0, s)
    w = jax.nn.softmax(s, axis=1)
    av = jnp.einsum("bto,bth->boh", w, value)              # (B, 1, H)
    return av, w


if __name__ == "__main__":
    B, T, H = 2, 8, 32

    key0 = jax.random.PRNGKey(0)
    keys = jax.random.split(key0, 9)

    query = jax.random.normal(keys[0], (B, T, H), dtype=jnp.float32)
    key_in = jax.random.normal(keys[1], (B, T, H), dtype=jnp.float32)
    value = jax.random.normal(keys[2], (B, T, H), dtype=jnp.float32)
    lengths = jnp.array([5, 8], dtype=jnp.int32)

    # Deterministic parameter init (shapes from nn.Linear(hidden, hidden) etc.).
    scale = 0.1
    wq = scale * jax.random.normal(keys[3], (H, H), dtype=jnp.float32)
    bq = scale * jax.random.normal(keys[4], (H,), dtype=jnp.float32)
    wk = scale * jax.random.normal(keys[5], (H, H), dtype=jnp.float32)
    bk = scale * jax.random.normal(keys[6], (H,), dtype=jnp.float32)
    wz = scale * jax.random.normal(keys[7], (H,), dtype=jnp.float32)
    bz = scale * jax.random.normal(keys[8], (1,), dtype=jnp.float32)
    params = (wq, bq, wk, bk, wz, bz)

    att_value, att_weights = bahdanau_attention(query, key_in, value, lengths, params)
    jax.block_until_ready((att_value, att_weights))

    ref_value, ref_weights = bahdanau_reference(query, key_in, value, lengths, params)
    assert att_value.shape == (B, 1, H) and att_weights.shape == (B, T, 1)
    assert jnp.allclose(att_value, ref_value, atol=1e-5, rtol=1e-5)
    assert jnp.allclose(att_weights, ref_weights, atol=1e-5, rtol=1e-5)

    print("KERNEL_OK")
</pallas_src>

<mosaic_0001>
module attributes {stable_mosaic.version = 11 : i64} {
  func.func @_bahdanau_kernel(%arg0: i32, %arg1: memref<2x1xi32, #tpu.memory_space<vmem>>, %arg2: memref<2x8x32xf32, #tpu.memory_space<vmem>>, %arg3: memref<2x8x32xf32, #tpu.memory_space<vmem>>, %arg4: memref<2x8x32xf32, #tpu.memory_space<vmem>>, %arg5: memref<32x32xf32, #tpu.memory_space<vmem>>, %arg6: memref<32x32xf32, #tpu.memory_space<vmem>>, %arg7: memref<1x32xf32, #tpu.memory_space<vmem>>, %arg8: memref<1x32xf32, #tpu.memory_space<vmem>>, %arg9: memref<1x1xf32, #tpu.memory_space<vmem>>, %arg10: memref<2x32xf32, #tpu.memory_space<vmem>>, %arg11: memref<2x8xf32, #tpu.memory_space<vmem>>) attributes {dimension_semantics = [#tpu.dimension_semantics<parallel>], iteration_bounds = array<i64: 1>, scalar_prefetch = 0 : i64, scratch_operands = 0 : i64, tpu.core_type = #tpu.core_type<tc>, window_params = [{transform_indices = @transform_0, window_bounds = array<i64: 2, 1>}, {transform_indices = @transform_1, window_bounds = array<i64: 2, 8, 32>}, {transform_indices = @transform_2, window_bounds = array<i64: 2, 8, 32>}, {transform_indices = @transform_3, window_bounds = array<i64: 2, 8, 32>}, {pipeline_mode = #tpu.pipeline_mode<synchronous>, transform_indices = @transform_4, window_bounds = array<i64: 32, 32>}, {pipeline_mode = #tpu.pipeline_mode<synchronous>, transform_indices = @transform_5, window_bounds = array<i64: 32, 32>}, {pipeline_mode = #tpu.pipeline_mode<synchronous>, transform_indices = @transform_6, window_bounds = array<i64: 1, 32>}, {pipeline_mode = #tpu.pipeline_mode<synchronous>, transform_indices = @transform_7, window_bounds = array<i64: 1, 32>}, {pipeline_mode = #tpu.pipeline_mode<synchronous>, transform_indices = @transform_8, window_bounds = array<i64: 1, 1>}, {transform_indices = @transform_9, window_bounds = array<i64: 2, 32>}, {transform_indices = @transform_10, window_bounds = array<i64: 2, 8>}]} {
    %c0 = arith.constant 0 : index
    %c0_0 = arith.constant 0 : index
    %c0_1 = arith.constant 0 : index
    %0 = vector.load %arg2[%c0, %c0_0, %c0_1] : memref<2x8x32xf32, #tpu.memory_space<vmem>>, vector<2x8x32xf32>
    %1 = vector.shape_cast %0 : vector<2x8x32xf32> to vector<16x32xf32>
    %c0_2 = arith.constant 0 : index
    %c0_3 = arith.constant 0 : index
    %c0_4 = arith.constant 0 : index
    %2 = vector.load %arg3[%c0_2, %c0_3, %c0_4] : memref<2x8x32xf32, #tpu.memory_space<vmem>>, vector<2x8x32xf32>
    %3 = vector.shape_cast %2 : vector<2x8x32xf32> to vector<16x32xf32>
    %c0_5 = arith.constant 0 : index
    %c0_6 = arith.constant 0 : index
    %4 = vector.load %arg5[%c0_5, %c0_6] : memref<32x32xf32, #tpu.memory_space<vmem>>, vector<32x32xf32>
    %cst = arith.constant dense<0.000000e+00> : vector<16x32xf32>
    %5 = tpu.matmul %1, %4, %cst {dimension_numbers = #tpu.dot_dimension_numbers<[1], [0], [0], [1], [0, 0, 1, 1], [], []>} : vector<16x32xf32>, vector<32x32xf32>, vector<16x32xf32> -> vector<16x32xf32>
    %c0_7 = arith.constant 0 : index
    %c0_8 = arith.constant 0 : index
    %6 = vector.load %arg6[%c0_7, %c0_8] : memref<32x32xf32, #tpu.memory_space<vmem>>, vector<32x32xf32>
    %cst_9 = arith.constant dense<0.000000e+00> : vector<16x32xf32>
    %7 = tpu.matmul %3, %6, %cst_9 {dimension_numbers = #tpu.dot_dimension_numbers<[1], [0], [0], [1], [0, 0, 1, 1], [], []>} : vector<16x32xf32>, vector<32x32xf32>, vector<16x32xf32> -> vector<16x32xf32>
    %8 = arith.addf %5, %7 : vector<16x32xf32>
    %c0_10 = arith.constant 0 : index
    %c0_11 = arith.constant 0 : index
    %9 = vector.load %arg7[%c0_10, %c0_11] : memref<1x32xf32, #tpu.memory_space<vmem>>, vector<1x32xf32>
    %10 = vector.broadcast %9 : vector<1x32xf32> to vector<16x32xf32>
    %11 = arith.addf %8, %10 : vector<16x32xf32>
    %12 = math.tanh %11 : vector<16x32xf32>
    %13 = vector.shape_cast %12 : vector<16x32xf32> to vector<2x8x32xf32>
    %c0_12 = arith.constant 0 : index
    %c0_13 = arith.constant 0 : index
    %14 = vector.load %arg8[%c0_12, %c0_13] : memref<1x32xf32, #tpu.memory_space<vmem>>, vector<1x32xf32>
    %15 = vector.shape_cast %14 : vector<1x32xf32> to vector<1x1x32xf32>
    %16 = vector.broadcast %15 : vector<1x1x32xf32> to vector<2x8x32xf32>
    %17 = arith.mulf %13, %16 : vector<2x8x32xf32>
    %cst_14 = arith.constant dense<0.000000e+00> : vector<2x8xf32>
    %18 = vector.multi_reduction <add>, %17, %cst_14 [2] : vector<2x8x32xf32> to vector<2x8xf32>
    %c0_15 = arith.constant 0 : index
    %c0_16 = arith.constant 0 : index
    %19 = vector.load %arg9[%c0_15, %c0_16] : memref<1x1xf32, #tpu.memory_space<vmem>>, vector<1x1xf32>
    %20 = vector.broadcast %19 : vector<1x1xf32> to vector<2x8xf32>
    %21 = arith.addf %18, %20 : vector<2x8xf32>
    %22 = tpu.iota {dimensions = array<i32: 1>} : vector<2x8xi32>
    %c0_17 = arith.constant 0 : index
    %c0_18 = arith.constant 0 : index
    %23 = vector.load %arg1[%c0_17, %c0_18] : memref<2x1xi32, #tpu.memory_space<vmem>>, vector<2x1xi32>
    %24 = vector.broadcast %23 : vector<2x1xi32> to vector<2x8xi32>
    %25 = arith.cmpi sge, %22, %24 : vector<2x8xi32>
    %cst_19 = arith.constant -1.000000e+09 : f32
    %26 = vector.broadcast %cst_19 : f32 to vector<2x8xf32>
    %27 = arith.select %25, %26, %21 : vector<2x8xi1>, vector<2x8xf32>
    %cst_20 = arith.constant dense<0xFF800000> : vector<2xf32>
    %28 = vector.multi_reduction <maximumf>, %27, %cst_20 [1] : vector<2x8xf32> to vector<2xf32>
    %29 = vector.shape_cast %28 : vector<2xf32> to vector<2x1xf32>
    %30 = vector.broadcast %29 : vector<2x1xf32> to vector<2x8xf32>
    %31 = arith.subf %27, %30 : vector<2x8xf32>
    %32 = math.exp %31 : vector<2x8xf32>
    %cst_21 = arith.constant dense<0.000000e+00> : vector<2xf32>
    %33 = vector.multi_reduction <add>, %32, %cst_21 [1] : vector<2x8xf32> to vector<2xf32>
    %34 = vector.shape_cast %33 : vector<2xf32> to vector<2x1xf32>
    %35 = tpu.reciprocal %34 : vector<2x1xf32> -> vector<2x1xf32>
    %36 = vector.broadcast %35 : vector<2x1xf32> to vector<2x8xf32>
    %37 = arith.mulf %32, %36 : vector<2x8xf32>
    %c0_22 = arith.constant 0 : index
    %c0_23 = arith.constant 0 : index
    %38 = vector.load %arg11[%c0_22, %c0_23] : memref<2x8xf32, #tpu.memory_space<vmem>>, vector<2x8xf32>
    tpu.vector_store %arg11[%c0_22, %c0_23], %37 {strides = array<i32>} : memref<2x8xf32, #tpu.memory_space<vmem>>, vector<2x8xf32>,
    %39 = vector.shape_cast %37 : vector<2x8xf32> to vector<2x8x1xf32>
    %c0_24 = arith.constant 0 : index
    %c0_25 = arith.constant 0 : index
    %c0_26 = arith.constant 0 : index
    %40 = vector.load %arg4[%c0_24, %c0_25, %c0_26] : memref<2x8x32xf32, #tpu.memory_space<vmem>>, vector<2x8x32xf32>
    %41 = vector.broadcast %39 : vector<2x8x1xf32> to vector<2x8x32xf32>
    %42 = arith.mulf %41, %40 : vector<2x8x32xf32>
    %cst_27 = arith.constant dense<0.000000e+00> : vector<2x32xf32>
    %43 = vector.multi_reduction <add>, %42, %cst_27 [1] : vector<2x8x32xf32> to vector<2x32xf32>
    %c0_28 = arith.constant 0 : index
    %c0_29 = arith.constant 0 : index
    %44 = vector.load %arg10[%c0_28, %c0_29] : memref<2x32xf32, #tpu.memory_space<vmem>>, vector<2x32xf32>
    tpu.vector_store %arg10[%c0_28, %c0_29], %43 {strides = array<i32>} : memref<2x32xf32, #tpu.memory_space<vmem>>, vector<2x32xf32>,
    return
  }
  func.func @transform_0(%arg0: i32) -> (i32, i32) {
    %c0_i32 = arith.constant 0 : i32
    %c0_i32_0 = arith.constant 0 : i32
    return %arg0, %c0_i32 : i32, i32
  }
  func.func @transform_1(%arg0: i32) -> (i32, i32, i32) {
    %c0_i32 = arith.constant 0 : i32
    %c0_i32_0 = arith.constant 0 : i32
    %c0_i32_1 = arith.constant 0 : i32
    return %arg0, %c0_i32, %c0_i32_0 : i32, i32, i32
  }
  func.func @transform_2(%arg0: i32) -> (i32, i32, i32) {
    %c0_i32 = arith.constant 0 : i32
    %c0_i32_0 = arith.constant 0 : i32
    %c0_i32_1 = arith.constant 0 : i32
    return %arg0, %c0_i32, %c0_i32_0 : i32, i32, i32
  }
  func.func @transform_3(%arg0: i32) -> (i32, i32, i32) {
    %c0_i32 = arith.constant 0 : i32
    %c0_i32_0 = arith.constant 0 : i32
    %c0_i32_1 = arith.constant 0 : i32
    return %arg0, %c0_i32, %c0_i32_0 : i32, i32, i32
  }
  func.func @transform_4(%arg0: i32) -> (i32, i32) {
    %c0_i32 = arith.constant 0 : i32
    %c0_i32_0 = arith.constant 0 : i32
    %c0_i32_1 = arith.constant 0 : i32
    return %c0_i32, %c0_i32_0 : i32, i32
  }
  func.func @transform_5(%arg0: i32) -> (i32, i32) {
    %c0_i32 = arith.constant 0 : i32
    %c0_i32_0 = arith.constant 0 : i32
    %c0_i32_1 = arith.constant 0 : i32
    return %c0_i32, %c0_i32_0 : i32, i32
  }
  func.func @transform_6(%arg0: i32) -> (i32, i32) {
    %c0_i32 = arith.constant 0 : i32
    %c0_i32_0 = arith.constant 0 : i32
    %c0_i32_1 = arith.constant 0 : i32
    return %c0_i32, %c0_i32_0 : i32, i32
  }
  func.func @transform_7(%arg0: i32) -> (i32, i32) {
    %c0_i32 = arith.constant 0 : i32
    %c0_i32_0 = arith.constant 0 : i32
    %c0_i32_1 = arith.constant 0 : i32
    return %c0_i32, %c0_i32_0 : i32, i32
  }
  func.func @transform_8(%arg0: i32) -> (i32, i32) {
    %c0_i32 = arith.constant 0 : i32
    %c0_i32_0 = arith.constant 0 : i32
    %c0_i32_1 = arith.constant 0 : i32
    return %c0_i32, %c0_i32_0 : i32, i32
  }
  func.func @transform_9(%arg0: i32) -> (i32, i32) {
    %c0_i32 = arith.constant 0 : i32
    %c0_i32_0 = arith.constant 0 : i32
    return %arg0, %c0_i32 : i32, i32
  }
  func.func @transform_10(%arg0: i32) -> (i32, i32) {
    %c0_i32 = arith.constant 0 : i32
    %c0_i32_0 = arith.constant 0 : i32
    return %arg0, %c0_i32 : i32, i32
  }
}

</mosaic_0001>

<llo_original>
// kernel: tpu_custom_call.1
$region0: #{tpu_custom_call.1}
  #allocation0 [shape = 'u32[]', space=smem, size = 0x4, offset = 0x4, fixed_abs, tag = 'smem constant byte address 0x4 - core index']
  #allocation1 [shape = 'u32[144,128]{1,0:T(1,128)}', space=vmem, size = 0x12000, scoped, tag = 'internal scratch']
  #allocation2 [shape = 'f32[1,1]{1,0:T(1,128)S(1)}', space=vmem, size = 0x200, scoped, tag = 'scoped memory for tpu_custom_call.1']
  %s0 = inlined_call_operand.vmem [shape: s32[2,1], index: 0, kind: input, shape index: {}]
  %s1 = inlined_call_operand.hbm [shape: f32[2,8,32], index: 1, kind: input, shape index: {}]
  %s2 = inlined_call_operand.hbm [shape: f32[2,8,32], index: 2, kind: input, shape index: {}]
  %s3 = inlined_call_operand.hbm [shape: f32[2,8,32], index: 3, kind: input, shape index: {}]
  %s4 = inlined_call_operand.hbm [shape: f32[32,32], index: 4, kind: input, shape index: {}]
  %s5 = inlined_call_operand.hbm [shape: f32[32,32], index: 5, kind: input, shape index: {}]
  %s6 = inlined_call_operand.vmem [shape: f32[1,32], index: 6, kind: input, shape index: {}]
  %s7 = inlined_call_operand.vmem [shape: f32[1,32], index: 7, kind: input, shape index: {}]
  %s8 = inlined_call_operand.<no memory space> [shape: f32[1,1], index: 8, kind: input, shape index: {}]
  %s9 = inlined_call_operand.hbm [shape: f32[2,32], index: 9, kind: output, shape index: {0}]
  %s10 = inlined_call_operand.hbm [shape: f32[2,8], index: 10, kind: output, shape index: {1}]
  %11 = xla_tuple %s9, %s10
  %s12 = sld [smem:[#allocation0]]
  $region74: #{tpu_custom_call.1} parent=0
    _
  %s14 = ssub.s32 1, %s12
  %s15 = scalar_select 0, %s14, %s12
  %v16 = vstv %s8
  %17 = vst [vmem:[#allocation2] sm:$0x1] %v16
  $region1: #{tpu_custom_call.1} parent=0
    #allocation3 [shape = 'u8[8192]{0}', space=vmem, size = 0x2000, scoped, tag = 'input window, operand 1, single buffered']
    #allocation4 [shape = 's32[1]{0}', space=sflag, size = 0x4, scoped, tag = 'scoped memory for tpu_custom_call.1']
    #allocation5 [shape = 's32[1]{0}', space=sflag, size = 0x4, scoped, tag = 'scoped memory for tpu_custom_call.1']
    #allocation6 [shape = 'u8[8192]{0}', space=vmem, size = 0x2000, scoped, tag = 'input window, operand 2, single buffered']
    #allocation7 [shape = 's32[1]{0}', space=sflag, size = 0x4, scoped, tag = 'scoped memory for tpu_custom_call.1']
    #allocation8 [shape = 'u8[8192]{0}', space=vmem, size = 0x2000, scoped, tag = 'input window, operand 3, single buffered']
    #allocation9 [shape = 'u8[16384]{0}', space=vmem, size = 0x4000, scoped, tag = 'input window, operand 4, single buffered']
    #allocation10 [shape = 's32[1]{0}', space=sflag, size = 0x4, scoped, tag = 'scoped memory for tpu_custom_call.1']
    #allocation11 [shape = 'u8[16384]{0}', space=vmem, size = 0x4000, scoped, tag = 'input window, operand 5, single buffered']
    #allocation12 [shape = 'u8[1024]{0}', space=vmem, size = 0x400, scoped, tag = 'output window, operand 0, single buffered']
    #allocation13 [shape = 'u8[1024]{0}', space=vmem, size = 0x400, scoped, tag = 'output window, operand 1, single buffered']
    #allocation14 [shape = 's32[1]{0}', space=sflag, size = 0x4, scoped, tag = 'scoped memory for tpu_custom_call.1']
    %18 = vsyncpa [#allocation4], 0
    %19 = vsyncpa [#allocation7], 0
    %20 = vsyncpa [#allocation10], 0
    %21 = vsyncpa [#allocation5], 0
    %22 = vsyncpa [#allocation14], 0
    // Predicated region
    $region2: #{tpu_custom_call.1} parent=1 // pred_check
      _
    $region3: #{tpu_custom_call.1} parent=1 // pred_check_branch
      %24 = sbr.rel (0) target = $region5
    $region4: #{tpu_custom_call.1} parent=1 // pred_region
      _
    $region5: #{tpu_custom_call.1} parent=1 // pred_fallthru
      _
    // Predicated region
    $region6: #{tpu_custom_call.1} parent=1 // pred_check
      _
    $region7: #{tpu_custom_call.1} parent=1 // pred_check_branch
      %26 = sbr.rel (0) target = $region9
    $region8: #{tpu_custom_call.1} parent=1 // pred_region
      %s28 = ssub.s32 256, 256
      %29 = vsyncadd [#allocation4], %s28
      %s30 = sshll.u32 [#allocation3], 4
      %s31 = int_to_ptr.vmem [resolvable:$true] %s30
      %36 = dma.hbm_to_vmem [thread:$0]  %s1, 256, %s31, [#allocation4], 128, 128, 8
    $region9: #{tpu_custom_call.1} parent=1 // pred_fallthru
      _
    // Predicated region
    $region10: #{tpu_custom_call.1} parent=1 // pred_check
      _
    $region11: #{tpu_custom_call.1} parent=1 // pred_check_branch
      %38 = sbr.rel (0) target = $region13
    $region12: #{tpu_custom_call.1} parent=1 // pred_region
      %s40 = ssub.s32 256, 256
      %41 = vsyncadd [#allocation7], %s40
      %s42 = sshll.u32 [#allocation6], 4
      %s43 = int_to_ptr.vmem [resolvable:$true] %s42
      %48 = dma.hbm_to_vmem [thread:$0]  %s2, 256, %s43, [#allocation7], 128, 128, 8
    $region13: #{tpu_custom_call.1} parent=1 // pred_fallthru
      _
    // Predicated region
    $region14: #{tpu_custom_call.1} parent=1 // pred_check
      _
    $region15: #{tpu_custom_call.1} parent=1 // pred_check_branch
      %50 = sbr.rel (0) target = $region17
    $region16: #{tpu_custom_call.1} parent=1 // pred_region
      %s52 = ssub.s32 256, 256
      %53 = vsyncadd [#allocation7], %s52
      %s54 = sshll.u32 [#allocation8], 4
      %s55 = int_to_ptr.vmem [resolvable:$true] %s54
      %60 = dma.hbm_to_vmem [thread:$0]  %s3, 256, %s55, [#allocation7], 128, 128, 8
    $region17: #{tpu_custom_call.1} parent=1 // pred_fallthru
      _
    // Predicated region
    $region18: #{tpu_custom_call.1} parent=1 // pred_check
      _
    $region19: #{tpu_custom_call.1} parent=1 // pred_check_branch
      %62 = sbr.rel (0) target = $region21
    $region20: #{tpu_custom_call.1} parent=1 // pred_region
      %s64 = ssub.s32 512, 512
      %65 = vsyncadd [#allocation10], %s64
      %s66 = sshll.u32 [#allocation9], 4
      %s67 = int_to_ptr.vmem [resolvable:$true] %s66
      %72 = dma.hbm_to_vmem [thread:$0]  %s4, 512, %s67, [#allocation10], 128, 128, 8
    $region21: #{tpu_custom_call.1} parent=1 // pred_fallthru
      _
    // Predicated region
    $region22: #{tpu_custom_call.1} parent=1 // pred_check
      _
    $region23: #{tpu_custom_call.1} parent=1 // pred_check_branch
      %74 = sbr.rel (0) target = $region25
    $region24: #{tpu_custom_call.1} parent=1 // pred_region
      %s76 = ssub.s32 512, 512
      %77 = vsyncadd [#allocation10], %s76
      %s78 = sshll.u32 [#allocation11], 4
      %s79 = int_to_ptr.vmem [resolvable:$true] %s78
      %84 = dma.hbm_to_vmem [thread:$0]  %s5, 512, %s79, [#allocation10], 128, 128, 8
    $region25: #{tpu_custom_call.1} parent=1 // pred_fallthru
      _
    // Predicated region
    $region26: #{tpu_custom_call.1} parent=1 // pred_check
      _
    $region27: #{tpu_custom_call.1} parent=1 // pred_check_branch
      %86 = sbr.rel (0) target = $region29
    $region28: #{tpu_custom_call.1} parent=1 // pred_region
      _
    $region29: #{tpu_custom_call.1} parent=1 // pred_fallthru
      _
    // Predicated region
    $region30: #{tpu_custom_call.1} parent=1 // pred_check
      _
    $region31: #{tpu_custom_call.1} parent=1 // pred_check_branch
      %88 = sbr.rel (0) target = $region33
    $region32: #{tpu_custom_call.1} parent=1 // pred_region
      _
    $region33: #{tpu_custom_call.1} parent=1 // pred_fallthru
      _
    // Predicated region
    $region34: #{tpu_custom_call.1} parent=1 // pred_check
      _
    $region35: #{tpu_custom_call.1} parent=1 // pred_check_branch
      %90 = sbr.rel (0) target = $region37
    $region36: #{tpu_custom_call.1} parent=1 // pred_region
      _
    $region37: #{tpu_custom_call.1} parent=1 // pred_fallthru
      _
    // Predicated region
    $region38: #{tpu_custom_call.1} parent=1 // pred_check
      _
    $region39: #{tpu_custom_call.1} parent=1 // pred_check_branch
      %92 = sbr.rel (0) target = $region41
    $region40: #{tpu_custom_call.1} parent=1 // pred_region
      %93 = dma.done [#allocation4], 256
    $region41: #{tpu_custom_call.1} parent=1 // pred_fallthru
      _
    // Predicated region
    $region42: #{tpu_custom_call.1} parent=1 // pred_check
      _
    $region43: #{tpu_custom_call.1} parent=1 // pred_check_branch
      %95 = sbr.rel (0) target = $region45
    $region44: #{tpu_custom_call.1} parent=1 // pred_region
      %96 = dma.done [#allocation7], 256
    $region45: #{tpu_custom_call.1} parent=1 // pred_fallthru
      _
    // Predicated region
    $region46: #{tpu_custom_call.1} parent=1 // pred_check
      _
    $region47: #{tpu_custom_call.1} parent=1 // pred_check_branch
      %98 = sbr.rel (0) target = $region49
    $region48: #{tpu_custom_call.1} parent=1 // pred_region
      %99 = dma.done [#allocation7], 256
    $region49: #{tpu_custom_call.1} parent=1 // pred_fallthru
      _
    // Predicated region
    $region50: #{tpu_custom_call.1} parent=1 // pred_check
      _
    $region51: #{tpu_custom_call.1} parent=1 // pred_check_branch
      %101 = sbr.rel (0) target = $region53
    $region52: #{tpu_custom_call.1} parent=1 // pred_region
      %102 = dma.done [#allocation10], 512
    $region53: #{tpu_custom_call.1} parent=1 // pred_fallthru
      _
    // Predicated region
    $region54: #{tpu_custom_call.1} parent=1 // pred_check
      _
    $region55: #{tpu_custom_call.1} parent=1 // pred_check_branch
      %104 = sbr.rel (0) target = $region57
    $region56: #{tpu_custom_call.1} parent=1 // pred_region
      %105 = dma.done [#allocation10], 512
    $region57: #{tpu_custom_call.1} parent=1 // pred_fallthru
      _
    %v106 = vld [vmem:[#allocation3] sm:$0xff]
    %v107 = vld [vmem:[#allocation3 + $0x8] sm:$0xff]
    %v108 = vld [vmem:[#allocation6] sm:$0xff]
    %v109 = vld [vmem:[#allocation6 + $0x8] sm:$0xff]
    %v110 = vld [vmem:[#allocation9] sm:$0xff]
    %v111 = vld [vmem:[#allocation9 + $0x8] sm:$0xff]
    %v112 = vld [vmem:[#allocation9 + $0x10] sm:$0xff]
    %v113 = vld [vmem:[#allocation9 + $0x18] sm:$0xff]
    %v114 = vld [vmem:[#allocation11] sm:$0xff]
    %v115 = vld [vmem:[#allocation11 + $0x8] sm:$0xff]
    %v116 = vld [vmem:[#allocation11 + $0x10] sm:$0xff]
    %v117 = vld [vmem:[#allocation11 + $0x18] sm:$0xff]
    %vm118 = vcmask 261120
    %v120 = vsel %vm118, %v108, 0
    %v123 = vsel %vm118, %v109, 0
    %125 = vmatprep.subr.mxu0 0.0
    %126 = vmatpush1.msra.mxu0 0.0
    %127 = vmatprep.subr.mxu0 0.0
    %128 = vmatpush1.msra.mxu0 0.0
    %129 = vmatprep.subr.mxu0 0.0
    %130 = vmatpush1.msra.mxu0 0.0
    %131 = vmatprep.subr.mxu0 0.0
    %132 = vmatpush1.msra.mxu0 0.0
    %133 = vmatprep.subr.mxu0 0.0
    %134 = vmatpush1.msra.mxu0 0.0
    %135 = vmatprep.subr.mxu0 0.0
    %136 = vmatpush1.msra.mxu0 0.0
    %137 = vmatprep.subr.mxu0 0.0
    %138 = vmatpush1.msra.mxu0 0.0
    %139 = vmatprep.subr.mxu0 0.0
    %140 = vmatpush1.msra.mxu0 0.0
    %141 = vmatprep.subr.mxu0 0.0
    %142 = vmatpush1.msra.mxu0 0.0
    %143 = vmatprep.subr.mxu0 0.0
    %144 = vmatpush1.msra.mxu0 0.0
    %145 = vmatprep.subr.mxu0 0.0
    %146 = vmatpush1.msra.mxu0 0.0
    %147 = vmatprep.subr.mxu0 0.0
    %148 = vmatpush1.msra.mxu0 0.0
    %149 = vmatprep.subr.mxu0 0.0
    %150 = vmatpush1.msra.mxu0 %v117
    %151 = vmatprep.subr.mxu0 0.0
    %152 = vmatpush1.msra.mxu0 %v116
    %153 = vmatprep.subr.mxu0 0.0
    %154 = vmatpush1.msra.mxu0 %v115
    %155 = vmatprep.subr.mxu0 0.0
    %156 = vmatpush1.msra.mxu0 %v114
    %157 = vmatprep.subr.mxu0 0.0
    %158 = vmatpush2.msra.mxu0 0.0
    %159 = vmatprep.subr.mxu0 0.0
    %160 = vmatpush2.msra.mxu0 0.0
    %161 = vmatprep.subr.mxu0 0.0
    %162 = vmatpush2.msra.mxu0 0.0
    %163 = vmatprep.subr.mxu0 0.0
    %164 = vmatpush2.msra.mxu0 0.0
    %165 = vmatprep.subr.mxu0 0.0
    %166 = vmatpush2.msra.mxu0 0.0
    %167 = vmatprep.subr.mxu0 0.0
    %168 = vmatpush2.msra.mxu0 0.0
    %169 = vmatprep.subr.mxu0 0.0
    %170 = vmatpush2.msra.mxu0 0.0
    %171 = vmatprep.subr.mxu0 0.0
    %172 = vmatpush2.msra.mxu0 0.0
    %173 = vmatprep.subr.mxu0 0.0
    %174 = vmatpush2.msra.mxu0 0.0
    %175 = vmatprep.subr.mxu0 0.0
    %176 = vmatpush2.msra.mxu0 0.0
    %177 = vmatprep.subr.mxu0 0.0
    %178 = vmatpush2.msra.mxu0 0.0
    %179 = vmatprep.subr.mxu0 0.0
    %180 = vmatpush2.msra.mxu0 0.0
    %181 = vmatprep.subr.mxu0 0.0
    %182 = vmatpush2.msra.mxu0 0.0
    %183 = vmatprep.subr.mxu0 0.0
    %184 = vmatpush2.msra.mxu0 0.0
    %185 = vmatprep.subr.mxu0 0.0
    %186 = vmatpush2.msra.mxu0 0.0
    %187 = vmatprep.subr.mxu0 0.0
    %188 = vmatpush2.msra.mxu0 0.0
    %189 = vmatprep.mubr.f32.mxu0 0.0
    %190 = vmatmul.mubr.f32.gmra.mxu0 %v120
    %v191 = vpop.f32.mrf.mxu0
    %v192 = vadd.f32 0.0, %v191
    %v193 = vpop.f32.mrf.mxu0
    %194 = vmatprep.mubr.f32.mxu0 0.0
    %195 = vmatmul.mubr.f32.gmra.mxu0 %v123
    %v196 = vpop.f32.mrf.mxu0
    %v197 = vadd.f32 0.0, %v196
    %v198 = vpop.f32.mrf.mxu0
    %199 = vdwg.mxu0
    %v201 = vsel %vm118, %v106, 0
    %v204 = vsel %vm118, %v107, 0
    %206 = vmatprep.subr.mxu0 0.0
    %207 = vmatpush1.msra.mxu0 0.0
    %208 = vmatprep.subr.mxu0 0.0
    %209 = vmatpush1.msra.mxu0 0.0
    %210 = vmatprep.subr.mxu0 0.0
    %211 = vmatpush1.msra.mxu0 0.0
    %212 = vmatprep.subr.mxu0 0.0
    %213 = vmatpush1.msra.mxu0 0.0
    %214 = vmatprep.subr.mxu0 0.0
    %215 = vmatpush1.msra.mxu0 0.0
    %216 = vmatprep.subr.mxu0 0.0
    %217 = vmatpush1.msra.mxu0 0.0
    %218 = vmatprep.subr.mxu0 0.0
    %219 = vmatpush1.msra.mxu0 0.0
    %220 = vmatprep.subr.mxu0 0.0
    %221 = vmatpush1.msra.mxu0 0.0
    %222 = vmatprep.subr.mxu0 0.0
    %223 = vmatpush1.msra.mxu0 0.0
    %224 = vmatprep.subr.mxu0 0.0
    %225 = vmatpush1.msra.mxu0 0.0
    %226 = vmatprep.subr.mxu0 0.0
    %227 = vmatpush1.msra.mxu0 0.0
    %228 = vmatprep.subr.mxu0 0.0
    %229 = vmatpush1.msra.mxu0 0.0
    %230 = vmatprep.subr.mxu0 0.0
    %231 = vmatpush1.msra.mxu0 %v113
    %232 = vmatprep.subr.mxu0 0.0
    %233 = vmatpush1.msra.mxu0 %v112
    %234 = vmatprep.subr.mxu0 0.0
    %235 = vmatpush1.msra.mxu0 %v111
    %236 = vmatprep.subr.mxu0 0.0
    %237 = vmatpush1.msra.mxu0 %v110
    %238 = vmatprep.subr.mxu0 0.0
    %239 = vmatpush2.msra.mxu0 0.0
    %240 = vmatprep.subr.mxu0 0.0
    %241 = vmatpush2.msra.mxu0 0.0
    %242 = vmatprep.subr.mxu0 0.0
    %243 = vmatpush2.msra.mxu0 0.0
    %244 = vmatprep.subr.mxu0 0.0
    %245 = vmatpush2.msra.mxu0 0.0
    %246 = vmatprep.subr.mxu0 0.0
    %247 = vmatpush2.msra.mxu0 0.0
    %248 = vmatprep.subr.mxu0 0.0
    %249 = vmatpush2.msra.mxu0 0.0
    %250 = vmatprep.subr.mxu0 0.0
    %251 = vmatpush2.msra.mxu0 0.0
    %252 = vmatprep.subr.mxu0 0.0
    %253 = vmatpush2.msra.mxu0 0.0
    %254 = vmatprep.subr.mxu0 0.0
    %255 = vmatpush2.msra.mxu0 0.0
    %256 = vmatprep.subr.mxu0 0.0
    %257 = vmatpush2.msra.mxu0 0.0
    %258 = vmatprep.subr.mxu0 0.0
    %259 = vmatpush2.msra.mxu0 0.0
    %260 = vmatprep.subr.mxu0 0.0
    %261 = vmatpush2.msra.mxu0 0.0
    %262 = vmatprep.subr.mxu0 0.0
    %263 = vmatpush2.msra.mxu0 0.0
    %264 = vmatprep.subr.mxu0 0.0
    %265 = vmatpush2.msra.mxu0 0.0
    %266 = vmatprep.subr.mxu0 0.0
    %267 = vmatpush2.msra.mxu0 0.0
    %268 = vmatprep.subr.mxu0 0.0
    %269 = vmatpush2.msra.mxu0 0.0
    %270 = vmatprep.mubr.f32.mxu0 0.0
    %271 = vmatmul.mubr.f32.gmra.mxu0 %v201
    %v272 = vpop.f32.mrf.mxu0
    %v273 = vadd.f32 %v192, %v272
    %v274 = vpop.f32.mrf.mxu0
    %275 = vmatprep.mubr.f32.mxu0 0.0
    %276 = vmatmul.mubr.f32.gmra.mxu0 %v204
    %v277 = vpop.f32.mrf.mxu0
    %v278 = vadd.f32 %v197, %v277
    %v279 = vpop.f32.mrf.mxu0
    %280 = vdwg.mxu0
    %v281 = vld [vmem:[%s6] sm:$0x1]
    %v283 = vlaneseq
    %v284 = vshrl.u32 %v283, 7
    %v285 = vsub.s32 0, %v284
    %v286 = vrot.slane %v281, %v285
    %v288 = vadd.f32 %v273, %v286
    %v289 = vadd.f32 %v278, %v286
    %v290 = vtanh.pop %v288
    %v291 = vtanh.pop %v289
    %v292 = vld [vmem:[%s7] sm:$0x1]
    %v294 = vlaneseq
    %v295 = vshrl.u32 %v294, 7
    %v296 = vsub.s32 0, %v295
    %v297 = vrot.slane %v292, %v296
    %v299 = vmul.f32 %v290, %v297
    %v300 = vmul.f32 %v291, %v297
    %v301 = vsel %vm118, %v299, 0.0
    %302 = vadd.xlane.f32.xlu0 %v301
    %v303 = vpop.xlane.xlu0 %302
    %v304 = vsel %vm118, %v300, 0.0
    %305 = vadd.xlane.f32.xlu0 %v304
    %v306 = vpop.xlane.xlu0 %305
    %v307 = vld [vmem:[#allocation2] sm:$0x1]
    %v309 = vlaneseq
    %v310 = vshrl.u32 %v309, 7
    %v311 = vsub.s32 0, %v310
    %v312 = vrot.slane %v307, %v311
    %313 = vset.pattern.permute.xlu0 0
    %314 = vperm.xlu0 %313, %v312
    %v315 = vpop.permute.xlu0 %314
    %v317 = vadd.f32 %v303, %v315
    %v318 = vadd.f32 %v306, %v315
    %v319 = vlaneseq
    %v320 = vand.u32 %v319, 127
    %v321 = vld [vmem:[%s0] sm:$0x3]
    %322 = vset.pattern.permute.xlu0 0
    %323 = vperm.xlu0 %322, %v321
    %v324 = vpop.permute.xlu0 %323
    %vm325 = vcmp.ge.s32.totalorder %v320, %v324
    %v328 = vlaneseq
    %v329 = vshrl.u32 %v328, 7
    %v330 = vsub.s32 %v320, %v329
    %v331 = vrot.slane %v317, %v330
    %v332 = vlaneseq
    %v333 = vshrl.u32 %v332, 7
    %v334 = vsub.s32 %v320, %v333
    %v335 = vrot.slane %v318, %v334
    %vm336 = vcmask 1041409
    %v337 = vsel %vm336, %v335, %v331
    %v339 = vsel %vm325, -1e+09, %v337
    %vm340 = vcmask 58368
    %v341 = vsel %vm340, %v339, -inf
    %342 = vmax.xlane.f32.xlu0 %v341
    %v343 = vpop.xlane.xlu0 %342
    %v344 = vsub.f32 %v339, %v343
    %v345 = vmul.f32 %v344, 1.442695
    %v346 = vpow.pop %v345
    %v347 = vsel %vm340, %v346, 0.0
    %348 = vadd.xlane.f32.xlu0 %v347
    %v349 = vpop.xlane.xlu0 %348
    %v350 = vrcp.pop %v349
    %v351 = vmul.f32 %v346, %v350
    %352 = vst.msk [vmem:[#allocation13] sm:$0x3] %vm340, %v351
    %v353 = vlaneseq
    %v354 = vshrl.u32 %v353, 7
    %v355 = vsub.s32 0, %v354
    %v356 = vrot.slane %v351, %v355
    %358 = vbcast.lane.b32.xlu0 %v356, 256
    %v359 = vpop.permute.xlu0 %358
    %v360 = vlaneseq
    %v361 = vshrl.u32 %v360, 7
    %v362 = vsub.s32 1, %v361
    %v363 = vrot.slane %v351, %v362
    %365 = vbcast.lane.b32.xlu0 %v363, 256
    %v366 = vpop.permute.xlu0 %365
    %v367 = vld [vmem:[#allocation8] sm:$0xff]
    %v368 = vld [vmem:[#allocation8 + $0x8] sm:$0xff]
    %v369 = vmul.f32 %v359, %v367
    %v370 = vmul.f32 %v366, %v368
    %v371 = vsel %vm118, %v369, 0.0
    %v372 = vrot.slane %v371, 4
    %v373 = vadd.f32 %v371, %v372
    %v374 = vrot.slane %v373, 2
    %v375 = vadd.f32 %v373, %v374
    %v376 = vrot.slane %v375, 1
    %v377 = vadd.f32 %v375, %v376
    %v378 = vsel %vm118, %v370, 0.0
    %v379 = vrot.slane %v378, 4
    %v380 = vadd.f32 %v378, %v379
    %v381 = vrot.slane %v380, 2
    %v382 = vadd.f32 %v380, %v381
    %v383 = vrot.slane %v382, 1
    %v384 = vadd.f32 %v382, %v383
    %v387 = vsel %vm336, %v384, %v377
    %vm389 = vcmask 254976
    %390 = vst.msk [vmem:[#allocation12] sm:$0x3] %vm389, %v387
    // Predicated region
    $region58: #{tpu_custom_call.1} parent=1 // pred_check
      _
    $region59: #{tpu_custom_call.1} parent=1 // pred_check_branch
      %392 = sbr.rel (0) target = $region61
    $region60: #{tpu_custom_call.1} parent=1 // pred_region
      %s394 = ssub.s32 32, 32
      %395 = vsyncadd [#allocation5], %s394
      %s397 = sshll.u32 [#allocation12], 4
      %s398 = int_to_ptr.vmem [resolvable:$true] %s397
      %400 = dma.vmem_to_hbm [thread:$0]  %s398, 32, %s9, [#allocation5]
    $region61: #{tpu_custom_call.1} parent=1 // pred_fallthru
      _
    // Predicated region
    $region62: #{tpu_custom_call.1} parent=1 // pred_check
      _
    $region63: #{tpu_custom_call.1} parent=1 // pred_check_branch
      %402 = sbr.rel (0) target = $region65
    $region64: #{tpu_custom_call.1} parent=1 // pred_region
      %s404 = ssub.s32 32, 32
      %405 = vsyncadd [#allocation14], %s404
      %s407 = sshll.u32 [#allocation13], 4
      %s408 = int_to_ptr.vmem [resolvable:$true] %s407
      %410 = dma.vmem_to_hbm [thread:$0]  %s408, 32, %s10, [#allocation14]
    $region65: #{tpu_custom_call.1} parent=1 // pred_fallthru
      _
    // Predicated region
    $region66: #{tpu_custom_call.1} parent=1 // pred_check
      _
    $region67: #{tpu_custom_call.1} parent=1 // pred_check_branch
      %412 = sbr.rel (0) target = $region69
    $region68: #{tpu_custom_call.1} parent=1 // pred_region
      %413 = dma.done [#allocation5], 32
    $region69: #{tpu_custom_call.1} parent=1 // pred_fallthru
      _
    // Predicated region
    $region70: #{tpu_custom_call.1} parent=1 // pred_check
      _
    $region71: #{tpu_custom_call.1} parent=1 // pred_check_branch
      %415 = sbr.rel (0) target = $region73
    $region72: #{tpu_custom_call.1} parent=1 // pred_region
      %416 = dma.done [#allocation14], 32
    $region73: #{tpu_custom_call.1} parent=1 // pred_fallthru
      _
    %417 = vsyncpa [#allocation4], 1
    %418 = vsyncpa [#allocation7], 1
    %419 = vsyncpa [#allocation10], 1
    %420 = vsyncpa [#allocation5], 1
    %421 = vsyncpa [#allocation14], 1

</llo_original>
